<compile_context>
chip_gen: v7x
topology: tpu7x:2x2x1
jax: 0.10.0
libtpu: 0.0.40
codegen_flags: <defaults>
</compile_context>

<pallas_src>
import jax
import jax.numpy as jnp
from jax.experimental import pallas as pl
from jax.experimental.pallas import tpu as pltpu


# ---------------------------------------------------------------------------
# Kernels
# ---------------------------------------------------------------------------

def _sa_cell_kernel_dense(x_ref, o_ref):
    """x_ref: (C, St, 128) VMEM tile, o_ref: (1, St, 128) VMEM tile."""
    c = x_ref.shape[0]
    inv_c = jnp.float32(1.0 / c)
    if c <= 16:
        # Single traversal of the block: accumulate sum and max together so
        # every element is read from VMEM once.
        s = x_ref[0].astype(jnp.float32)
        m = s
        for i in range(1, c):
            xi = x_ref[i].astype(jnp.float32)
            s = s + xi
            m = jnp.maximum(m, xi)
    else:
        # Large-C fallback: whole-block reductions (still intra-block).
        x = x_ref[...].astype(jnp.float32)
        s = jnp.sum(x, axis=0)
        m = jnp.max(x, axis=0)
    o_ref[0] = jnp.maximum(s * inv_c + m, 0.0).astype(o_ref.dtype)


def _sa_cell_kernel_flat(x_ref, o_ref):
    """Fallback (H*W not a multiple of 128). x_ref: (C, HW), o_ref: (1, HW)."""
    x = x_ref[...].astype(jnp.float32)
    c = x.shape[0]
    s = jnp.sum(x, axis=0, keepdims=True)
    m = jnp.max(x, axis=0, keepdims=True)
    o_ref[...] = jnp.maximum(s * jnp.float32(1.0 / c) + m, 0.0).astype(o_ref.dtype)


# ---------------------------------------------------------------------------
# Wrapper
# ---------------------------------------------------------------------------

def _pick_spatial_tile(c: int, s: int, itemsize: int) -> int:
    """Rows of 128 lanes per block so the input block is ~<= 4 MiB.

    4 MiB per input buffer keeps 2x(in) + 2x(out) double-buffering under the
    scoped-VMEM default on v5e (16 MiB) and well under v6e/v7x (32 MiB).
    """
    budget_elems = (4 * 1024 * 1024) // itemsize
    st = budget_elems // (c * 128)
    if st >= s:
        return s                       # full extent: always layout-legal
    st = max(8, (st // 8) * 8)         # sublane-aligned tile
    return s if st >= s else st


def sa_cell(x: jax.Array) -> jax.Array:
    """Pallas implementation of SA_Cell.forward.  x: (N, C, H, W)."""
    n, c, h, w = x.shape
    hw = h * w
    x_flat = x.reshape(n, c, hw)       # metadata-only reshape (contiguous)

    if hw % 128 == 0:
        # Lane-dense main path: spatial axis -> (S, 128) dense tiles.
        s = hw // 128
        st = _pick_spatial_tile(c, s, x.dtype.itemsize)
        x4 = x_flat.reshape(n, c, s, 128)
        out = pl.pallas_call(
            _sa_cell_kernel_dense,
            out_shape=jax.ShapeDtypeStruct((n, 1, s, 128), x.dtype),
            grid_spec=pltpu.PrefetchScalarGridSpec(
                num_scalar_prefetch=0,
                grid=(n, pl.cdiv(s, st)),
                in_specs=[
                    pl.BlockSpec((pl.Squeezed(), c, st, 128),
                                 lambda i, j: (i, 0, j, 0)),
                ],
                out_specs=pl.BlockSpec((pl.Squeezed(), 1, st, 128),
                                       lambda i, j: (i, 0, j, 0)),
            ),
            compiler_params=pltpu.CompilerParams(
                dimension_semantics=("parallel", "parallel"),
                vmem_limit_bytes=32 * 1024 * 1024,
            ),
        )(x4)
        return out.reshape(n, 1, h, w)

    # Fallback: H*W not a multiple of 128 -> full-extent spatial block.
    out = pl.pallas_call(
        _sa_cell_kernel_flat,
        out_shape=jax.ShapeDtypeStruct((n, 1, hw), x.dtype),
        grid_spec=pltpu.PrefetchScalarGridSpec(
            num_scalar_prefetch=0,
            grid=(n,),
            in_specs=[
                pl.BlockSpec((pl.Squeezed(), c, hw), lambda i: (i, 0, 0)),
            ],
            out_specs=pl.BlockSpec((pl.Squeezed(), 1, hw), lambda i: (i, 0, 0)),
        ),
        compiler_params=pltpu.CompilerParams(
            dimension_semantics=("parallel",),
            vmem_limit_bytes=32 * 1024 * 1024,
        ),
    )(x_flat)
    return out.reshape(n, 1, h, w)


def sa_cell_ref(x: jax.Array) -> jax.Array:
    """Pure-JAX reference for correctness checking."""
    mean = jnp.mean(x, axis=1, keepdims=True)
    mx = jnp.max(x, axis=1, keepdims=True)
    return jnp.maximum(mean + mx, 0.0)


if __name__ == "__main__":
    key = jax.random.PRNGKey(0)

    # Main (lane-dense) path: H*W = 256 is a multiple of 128.
    x = jax.random.normal(key, (2, 4, 16, 16), dtype=jnp.float32)
    out = jax.block_until_ready(sa_cell(x))
    ref = jax.block_until_ready(sa_cell_ref(x))
    assert out.shape == (2, 1, 16, 16), out.shape
    assert jnp.allclose(out, ref, atol=1e-5, rtol=1e-5), "mismatch (dense path)"

    # Fallback path: H*W = 49 is not a multiple of 128.
    x2 = jax.random.normal(jax.random.PRNGKey(1), (2, 4, 7, 7), dtype=jnp.float32)
    out2 = jax.block_until_ready(sa_cell(x2))
    ref2 = jax.block_until_ready(sa_cell_ref(x2))
    assert out2.shape == (2, 1, 7, 7), out2.shape
    assert jnp.allclose(out2, ref2, atol=1e-5, rtol=1e-5), "mismatch (flat path)"

    print("KERNEL_OK")
</pallas_src>

<mosaic_0001>
module attributes {stable_mosaic.version = 11 : i64} {
  func.func @_sa_cell_kernel_dense(%arg0: i32, %arg1: i32, %arg2: memref<1x4x2x128xf32, #tpu.memory_space<vmem>>, %arg3: memref<1x1x2x128xf32, #tpu.memory_space<vmem>>) attributes {dimension_semantics = [#tpu.dimension_semantics<parallel>, #tpu.dimension_semantics<parallel>], iteration_bounds = array<i64: 2, 1>, scalar_prefetch = 0 : i64, scratch_operands = 0 : i64, tpu.core_type = #tpu.core_type<tc>, window_params = [{transform_indices = @transform_0, window_bounds = array<i64: 1, 4, 2, 128>}, {transform_indices = @transform_1, window_bounds = array<i64: 1, 1, 2, 128>}]} {
    %c0 = arith.constant 0 : index
    %c0_0 = arith.constant 0 : index
    %c0_1 = arith.constant 0 : index
    %c0_2 = arith.constant 0 : index
    %0 = vector.load %arg2[%c0, %c0_0, %c0_1, %c0_2] : memref<1x4x2x128xf32, #tpu.memory_space<vmem>>, vector<1x1x2x128xf32>
    %1 = vector.shape_cast %0 : vector<1x1x2x128xf32> to vector<2x128xf32>
    %c0_3 = arith.constant 0 : index
    %c1 = arith.constant 1 : index
    %c0_4 = arith.constant 0 : index
    %c0_5 = arith.constant 0 : index
    %2 = vector.load %arg2[%c0_3, %c1, %c0_4, %c0_5] : memref<1x4x2x128xf32, #tpu.memory_space<vmem>>, vector<1x1x2x128xf32>
    %3 = vector.shape_cast %2 : vector<1x1x2x128xf32> to vector<2x128xf32>
    %4 = arith.addf %1, %3 : vector<2x128xf32>
    %5 = arith.maximumf %1, %3 : vector<2x128xf32>
    %c0_6 = arith.constant 0 : index
    %c2 = arith.constant 2 : index
    %c0_7 = arith.constant 0 : index
    %c0_8 = arith.constant 0 : index
    %6 = vector.load %arg2[%c0_6, %c2, %c0_7, %c0_8] : memref<1x4x2x128xf32, #tpu.memory_space<vmem>>, vector<1x1x2x128xf32>
    %7 = vector.shape_cast %6 : vector<1x1x2x128xf32> to vector<2x128xf32>
    %8 = arith.addf %4, %7 : vector<2x128xf32>
    %9 = arith.maximumf %5, %7 : vector<2x128xf32>
    %c0_9 = arith.constant 0 : index
    %c3 = arith.constant 3 : index
    %c0_10 = arith.constant 0 : index
    %c0_11 = arith.constant 0 : index
    %10 = vector.load %arg2[%c0_9, %c3, %c0_10, %c0_11] : memref<1x4x2x128xf32, #tpu.memory_space<vmem>>, vector<1x1x2x128xf32>
    %11 = vector.shape_cast %10 : vector<1x1x2x128xf32> to vector<2x128xf32>
    %12 = arith.addf %8, %11 : vector<2x128xf32>
    %13 = arith.maximumf %9, %11 : vector<2x128xf32>
    %cst = arith.constant 2.500000e-01 : f32
    %14 = vector.broadcast %cst : f32 to vector<2x128xf32>
    %15 = arith.mulf %12, %14 : vector<2x128xf32>
    %16 = arith.addf %15, %13 : vector<2x128xf32>
    %cst_12 = arith.constant 0.000000e+00 : f32
    %17 = vector.broadcast %cst_12 : f32 to vector<2x128xf32>
    %18 = arith.maximumf %16, %17 : vector<2x128xf32>
    %c0_13 = arith.constant 0 : index
    %c0_14 = arith.constant 0 : index
    %c0_15 = arith.constant 0 : index
    %c0_16 = arith.constant 0 : index
    %19 = vector.load %arg3[%c0_13, %c0_14, %c0_15, %c0_16] : memref<1x1x2x128xf32, #tpu.memory_space<vmem>>, vector<1x1x2x128xf32>
    %20 = vector.shape_cast %19 : vector<1x1x2x128xf32> to vector<2x128xf32>
    %21 = vector.shape_cast %18 : vector<2x128xf32> to vector<1x1x2x128xf32>
    tpu.vector_store %arg3[%c0_13, %c0_14, %c0_15, %c0_16], %21 {strides = array<i32>} : memref<1x1x2x128xf32, #tpu.memory_space<vmem>>, vector<1x1x2x128xf32>,
    return
  }
  func.func @transform_0(%arg0: i32, %arg1: i32) -> (i32, i32, i32, i32) {
    %c0_i32 = arith.constant 0 : i32
    %c0_i32_0 = arith.constant 0 : i32
    %c0_i32_1 = arith.constant 0 : i32
    return %arg0, %c0_i32, %arg1, %c0_i32_0 : i32, i32, i32, i32
  }
  func.func @transform_1(%arg0: i32, %arg1: i32) -> (i32, i32, i32, i32) {
    %c0_i32 = arith.constant 0 : i32
    %c0_i32_0 = arith.constant 0 : i32
    %c0_i32_1 = arith.constant 0 : i32
    return %arg0, %c0_i32, %arg1, %c0_i32_0 : i32, i32, i32, i32
  }
}

</mosaic_0001>

<llo_original>
// kernel: tpu_custom_call.1
$region0: #{tpu_custom_call.1}
  #allocation0 [shape = 'u32[]', space=smem, size = 0x4, offset = 0x4, fixed_abs, tag = 'smem constant byte address 0x4 - core index']
  #allocation1 [shape = 'u32[144,128]{1,0:T(1,128)}', space=vmem, size = 0x12000, scoped, tag = 'internal scratch']
  %s0 = inlined_call_operand.hbm [shape: f32[2,4,2,128], index: 0, kind: input, shape index: {}]
  %s1 = inlined_call_operand.hbm [shape: f32[2,1,2,128], index: 1, kind: output, shape index: {}]
  %s2 = sld [smem:[#allocation0]]
  $region41: #{tpu_custom_call.1} parent=0
    _
  %s4 = ssub.s32 1, %s2
  %s5 = scalar_select 0, %s4, %s2
  $region1: #{tpu_custom_call.1} parent=0
    #allocation2 [shape = 'u8[8192]{0}', space=vmem, size = 0x2000, scoped, tag = 'input window, operand 0']
    #allocation3 [shape = 's32[2]{0}', space=sflag, size = 0x8, scoped, tag = 'scoped memory for tpu_custom_call.1']
    #allocation4 [shape = 's32[2]{0}', space=sflag, size = 0x8, scoped, tag = 'scoped memory for tpu_custom_call.1']
    #allocation5 [shape = 'u8[2048]{0}', space=vmem, size = 0x800, scoped, tag = 'output window, operand 0']
    %6 = vsyncpa [#allocation3], 0
    %s7 = scalar_lea.sflag [#allocation3], 1
    %8 = vsyncpa %s7, 0
    %9 = vsyncpa [#allocation4], 0
    %s10 = scalar_lea.sflag [#allocation4], 1
    %11 = vsyncpa %s10, 0
    loop: start=0, step=1, limit=4
    $region2: #{tpu_custom_call.1} parent=1 // loop_pre_header
      _
    $region3: #{tpu_custom_call.1} parent=1 // loop_header
      %s13 = sphi 0, %s17
      %p14 = scmp.ge.s32.totalorder %s13, 4
      %s20 = sphi 0, %s32
      %s21 = sphi 0, %s28
      %s22 = sphi 0, %s20
      %s23 = sphi 0, %s21
      %s24 = sphi 0, %s22
      %s25 = sphi 0, %s23
      %s37 = sphi 0, %s39
      %s40 = sphi 0, %s37
      %s41 = sphi 0, %s40
      %s57 = sphi 0, %s41
      %s65 = sphi 0, %s67
      %s68 = sphi 0, %s65
      %s69 = sphi 0, %s68
      %s85 = sphi 0, %s69
    $region4: #{tpu_custom_call.1} parent=1 // loop_header_branch
      %16 = sbr.rel (%p14) target = $region8
    $region5: #{tpu_custom_call.1} parent=1 // loop_body
      %s18 = ssub.s32 %s13, 1
      %s19 = ssub.s32 %s13, 2
      %s26 = sadd.s32 1, %s21
      %p27 = scmp.ge.s32.totalorder %s26, 1
      %s28 = scalar_select %p27, 0, %s26
      %s29 = sadd.s32 1, %s20
      %s30 = scalar_select %p27, %s29, %s20
      %p31 = scmp.ge.s32.totalorder %s30, 2
      %s32 = scalar_select %p31, 0, %s30
      %s33 = ssub.s32 %s20, %s32
      %s34 = ssub.s32 %s21, %s28
      %s35 = sor.u32 %s33, %s34
      %p36 = scmp.eq.s32.totalorder %s35, 0
      %s38 = sadd.s32 %s37, 1
      %s39 = scalar_select %p36, %s37, %s38
      %p42 = pneg %p36
      %p43 = scmp.eq.s32.totalorder %s13, 1
      %p44 = por %p42, %p43
      %p45 = scmp.ne.s32.totalorder %s37, %s40
      %p46 = scmp.eq.s32.totalorder %s13, 0
      %p47 = por %p45, %p46
      %p48 = scmp.ne.s32.totalorder %s37, %s40
      %p49 = scmp.eq.s32.totalorder %s18, 1
      %p50 = por %p48, %p49
      %p51 = scmp.ne.s32.totalorder %s40, %s41
      %p52 = scmp.eq.s32.totalorder %s18, 0
      %p53 = por %p51, %p52
      %p54 = scmp.ne.s32.totalorder %s40, %s41
      %p55 = scmp.eq.s32.totalorder %s19, 1
      %p56 = por %p54, %p55
      %p58 = scmp.ne.s32.totalorder %s41, %s57
      %p59 = scmp.eq.s32.totalorder %s19, 0
      %p60 = por %p58, %p59
      %s61 = ssub.s32 %s20, %s32
      %s62 = ssub.s32 %s21, %s28
      %s63 = sor.u32 %s61, %s62
      %p64 = scmp.eq.s32.totalorder %s63, 0
      %s66 = sadd.s32 %s65, 1
      %s67 = scalar_select %p64, %s65, %s66
      %p70 = pneg %p64
      %p71 = scmp.eq.s32.totalorder %s13, 1
      %p72 = por %p70, %p71
      %p73 = scmp.ne.s32.totalorder %s65, %s68
      %p74 = scmp.eq.s32.totalorder %s13, 0
      %p75 = por %p73, %p74
      %p76 = scmp.ne.s32.totalorder %s65, %s68
      %p77 = scmp.eq.s32.totalorder %s18, 1
      %p78 = por %p76, %p77
      %p79 = scmp.ne.s32.totalorder %s68, %s69
      %p80 = scmp.eq.s32.totalorder %s18, 0
      %p81 = por %p79, %p80
      %p82 = scmp.ne.s32.totalorder %s68, %s69
      %p83 = scmp.eq.s32.totalorder %s19, 1
      %p84 = por %p82, %p83
      %p86 = scmp.ne.s32.totalorder %s69, %s85
      %p87 = scmp.eq.s32.totalorder %s19, 0
      %p88 = por %p86, %p87
      %p89 = scmp.le.s32.totalorder 1, %s13
      %p90 = scmp.lt.s32.totalorder %s13, 3
      %p91 = pnand %p89, %p90
      %p92 = pneg %p91
      // Predicated region
      $region9: #{tpu_custom_call.1} parent=5 // pred_check
        _
      $region10: #{tpu_custom_call.1} parent=5 // pred_check_branch
        %94 = sbr.rel (%p91) target = $region12
      $region11: #{tpu_custom_call.1} parent=5 // pred_region
        %s95 = ssub.s32 %s13, 1
      $region12: #{tpu_custom_call.1} parent=5 // pred_fallthru
        _
      %p96 = scmp.lt.s32.totalorder %s13, 2
      // Predicated region
      $region13: #{tpu_custom_call.1} parent=5 // pred_check
        %p97 = pneg %p96
      $region14: #{tpu_custom_call.1} parent=5 // pred_check_branch
        %99 = sbr.rel (%p97) target = $region16
      $region15: #{tpu_custom_call.1} parent=5 // pred_region
        // Predicated region
        $region17: #{tpu_custom_call.1} parent=15 // pred_check
          %p100 = pneg %p47
        $region18: #{tpu_custom_call.1} parent=15 // pred_check_branch
          %102 = sbr.rel (%p100) target = $region20
        $region19: #{tpu_custom_call.1} parent=15 // pred_region
          %s103 = sand.u32 %s37, 1
          %s104 = scalar_lea.sflag [#allocation3], %s103
          %s105 = sand.u32 %s37, 1
          %s106 = smul.addr %s105, 8
          %s107 = scalar_lea.vmem [#allocation2], %s106
          %s109 = ssub.s32 128, 128
          %110 = vsyncadd %s104, %s109
          %s111 = smul.addr %s20, 4
          %s112 = sadd.s32 %s21, %s111
          %s113 = smul.addr %s112, 32
          %s114 = scalar_lea.hbm %s0, %s113
          %s115 = sshll.u32 %s107, 4
          %s116 = int_to_ptr.vmem [resolvable:$true] %s115
          %121 = dma.hbm_to_vmem [thread:$0]  %s114, 128, %s116, %s104, 32, 32, 2
        $region20: #{tpu_custom_call.1} parent=15 // pred_fallthru
          _
      $region16: #{tpu_custom_call.1} parent=5 // pred_fallthru
        _
      %p122 = scmp.le.s32.totalorder 1, %s13
      %p123 = scmp.lt.s32.totalorder %s13, 3
      %p124 = pnand %p122, %p123
      %p125 = pneg %p124
      // Predicated region
      $region21: #{tpu_custom_call.1} parent=5 // pred_check
        _
      $region22: #{tpu_custom_call.1} parent=5 // pred_check_branch
        %127 = sbr.rel (%p124) target = $region24
      $region23: #{tpu_custom_call.1} parent=5 // pred_region
        %s128 = ssub.s32 %s13, 1
        %s129 = sand.u32 %s40, 1
        %s130 = scalar_lea.sflag [#allocation3], %s129
        %s131 = sand.u32 %s40, 1
        %s132 = smul.addr %s131, 8
        %s133 = scalar_lea.vmem [#allocation2], %s132
        // Predicated region
        $region25: #{tpu_custom_call.1} parent=23 // pred_check
          %p134 = pneg %p53
        $region26: #{tpu_custom_call.1} parent=23 // pred_check_branch
          %136 = sbr.rel (%p134) target = $region28
        $region27: #{tpu_custom_call.1} parent=23 // pred_region
          %137 = dma.done %s130, 128
        $region28: #{tpu_custom_call.1} parent=23 // pred_fallthru
          _
        %s138 = sand.u32 %s40, 1
        %s139 = scalar_lea.sflag [#allocation3], %s138
        %s140 = sand.u32 %s40, 1
        %s141 = smul.addr %s140, 8
        %s142 = scalar_lea.vmem [#allocation2], %s141
        %p143 = pneg %p53
        %p144 = pneg %p50
        %p145 = pneg %p81
        %p146 = pneg %p78
        %s147 = sand.u32 %s68, 1
        %s148 = scalar_lea.sflag [#allocation4], %s147
        %s149 = sand.u32 %s68, 1
        %s150 = smul.addr %s149, 2
        %s151 = scalar_lea.vmem [#allocation5], %s150
        %v152 = vld [vmem:[%s133] sm:$0x3]
        %s153 = scalar_lea.vmem %s133, 2 [#allocation2]
        %v154 = vld [vmem:[%s153] sm:$0x3]
        %v155 = vadd.f32 %v152, %v154
        %v156 = vmax.f32 %v152, %v154
        %s157 = scalar_lea.vmem %s133, 4 [#allocation2]
        %v158 = vld [vmem:[%s157] sm:$0x3]
        %v159 = vadd.f32 %v155, %v158
        %v160 = vmax.f32 %v156, %v158
        %s161 = scalar_lea.vmem %s133, 6 [#allocation2]
        %v162 = vld [vmem:[%s161] sm:$0x3]
        %v163 = vadd.f32 %v159, %v162
        %v164 = vmax.f32 %v160, %v162
        %v165 = vmul.f32 %v163, 0.25
        %v166 = vadd.f32 %v165, %v164
        %v167 = vmax.f32 %v166, 0.0
        %168 = vst [vmem:[%s151] sm:$0x3] %v167
        %s169 = sand.u32 %s68, 1
        %s170 = scalar_lea.sflag [#allocation4], %s169
        %s171 = sand.u32 %s68, 1
        %s172 = smul.addr %s171, 2
        %s173 = scalar_lea.vmem [#allocation5], %s172
        // Predicated region
        $region29: #{tpu_custom_call.1} parent=23 // pred_check
          %p174 = pneg %p78
        $region30: #{tpu_custom_call.1} parent=23 // pred_check_branch
          %176 = sbr.rel (%p174) target = $region32
        $region31: #{tpu_custom_call.1} parent=23 // pred_region
          %s178 = ssub.s32 32, 32
          %179 = vsyncadd %s170, %s178
          %s180 = sadd.s32 %s23, %s22
          %s181 = smul.addr %s180, 32
          %s182 = scalar_lea.hbm %s1, %s181
          %s184 = sshll.u32 %s173, 4
          %s185 = int_to_ptr.vmem [resolvable:$true] %s184
          %187 = dma.vmem_to_hbm [thread:$0]  %s185, 32, %s182, %s170
        $region32: #{tpu_custom_call.1} parent=23 // pred_fallthru
          _
      $region24: #{tpu_custom_call.1} parent=5 // pred_fallthru
        _
      %p188 = scmp.le.s32.totalorder 2, %s13
      // Predicated region
      $region33: #{tpu_custom_call.1} parent=5 // pred_check
        %p189 = pneg %p188
      $region34: #{tpu_custom_call.1} parent=5 // pred_check_branch
        %191 = sbr.rel (%p189) target = $region36
      $region35: #{tpu_custom_call.1} parent=5 // pred_region
        %s192 = ssub.s32 %s13, 2
        // Predicated region
        $region37: #{tpu_custom_call.1} parent=35 // pred_check
          %p193 = pneg %p84
        $region38: #{tpu_custom_call.1} parent=35 // pred_check_branch
          %195 = sbr.rel (%p193) target = $region40
        $region39: #{tpu_custom_call.1} parent=35 // pred_region
          %s196 = sand.u32 %s69, 1
          %s197 = scalar_lea.sflag [#allocation4], %s196
          %s198 = sand.u32 %s69, 1
          %s199 = smul.addr %s198, 2
          %s200 = scalar_lea.vmem [#allocation5], %s199
          %201 = dma.done %s197, 32
        $region40: #{tpu_custom_call.1} parent=35 // pred_fallthru
          _
      $region36: #{tpu_custom_call.1} parent=5 // pred_fallthru
        _
    $region6: #{tpu_custom_call.1} parent=1 // loop_footer
      %s17 = sadd.s32 1, %s13
    $region7: #{tpu_custom_call.1} parent=1 // loop_footer_branch
      %12 = sbr.rel target = $region3
    $region8: #{tpu_custom_call.1} parent=1 // loop_exit
      _
    %202 = vsyncpa [#allocation3], 1
    %s203 = scalar_lea.sflag [#allocation3], 1
    %204 = vsyncpa %s203, 1
    %205 = vsyncpa [#allocation4], 1
    %s206 = scalar_lea.sflag [#allocation4], 1
    %207 = vsyncpa %s206, 1

</llo_original>
